<compile_context>
chip_gen: v5e
topology: v5e:2x2
jax: 0.10.0
libtpu: 0.0.40
codegen_flags: <defaults>
</compile_context>

<pallas_src>
import functools

import jax
import jax.numpy as jnp
from jax.experimental import pallas as pl
from jax.experimental.pallas import tpu as pltpu


MSG_LEN = 32           # watermark message length (bits)
THRESHOLD = 0.8        # module's `th`
TK_DEFAULT = 32768     # reduction tile (lanes of the streamed (L, TK) W tile)


def _effective_tk(D, tk):
    """Tile size actually used: multiple of 128, never larger than 128-aligned D."""
    return min(tk, pl.cdiv(D, 128) * 128)


def _wm_detector_kernel(x_ref, wt_ref, gt_ref, out_ref, acc_ref):
    # x_ref  : (1, TK)  f32  slice of the flattened image (CHW order, matches W cols)
    # wt_ref : (L, TK)  bf16 lane-dense slice of the transposed decoder weights
    #                        (1/255 already folded in)
    # gt_ref : (1, L)   f32  ground-truth bits (resident across the grid)
    # out_ref: (1, 2)   i32  one-hot class (resident; written at the last step)
    # acc_ref: (1, L)   f32  logit accumulator (VMEM scratch)
    k = pl.program_id(0)
    L = gt_ref.shape[1]

    @pl.when(k == 0)
    def _():
        acc_ref[...] = jnp.zeros_like(acc_ref)

    # clamp(x, 0, 1) then uint8 quantization: floor(x * 255). Integer levels
    # 0..255 are exactly representable in bf16, so the cast below is lossless.
    q = jnp.floor(jnp.clip(x_ref[...], 0.0, 1.0) * 255.0)      # (1, TK) f32

    # Contract over TK: (1, TK) . (L, TK)^T -> (1, L).  The RHS contraction is
    # on its last (lane) dim, i.e. the "trans_b" matmul form, so no in-kernel
    # transpose/copy of the W tile is materialized.
    acc_ref[...] += jax.lax.dot_general(
        q.astype(jnp.bfloat16), wt_ref[...],
        dimension_numbers=(((1,), (1,)), ((), ())),
        preferred_element_type=jnp.float32)

    @pl.when(k == pl.num_programs(0) - 1)
    def _():
        logits = acc_ref[...]                                   # [1, L]
        decoded = (logits > 0.0).astype(jnp.float32)            # [1, L]
        gt = gt_ref[...]
        # bit_acc = 1 - sum(|decoded - gt|) / L
        bit_acc = 1.0 - jnp.sum(jnp.abs(decoded - gt), axis=1,
                                keepdims=True) / L              # [1, 1]
        cls = jnp.logical_or(bit_acc > THRESHOLD,
                             bit_acc < 1.0 - THRESHOLD)
        idx = cls.astype(jnp.int32)                             # [1, 1]
        # F.one_hot(class_idx, num_classes=2) -> [1, 2]
        col = jax.lax.broadcasted_iota(jnp.int32, (1, 2), 1)
        out_ref[...] = (col == idx).astype(jnp.int32)


def prepare_decoder_weights(w_hwc, C, H, W, *, tk=TK_DEFAULT):
    """One-time weight prep (static, off the hot path):
      - permute from HWC pixel order (what the decoder sees after the module's
        np.transpose([1, 2, 0])) to CHW order, so the per-call wrapper can feed
        x[0].reshape(1, D) with no transpose,
      - fold the decoder's internal 1/255 normalization into the weights,
      - narrow to bf16 (halves HBM traffic of the bandwidth-bound W stream),
      - TRANSPOSE to (L, D) so streamed tiles are lane-dense (L=32 sublanes,
        TK lanes) instead of lane-padded (TK, 32),
      - zero-pad D up to a multiple of the reduction tile here, once, so the
        jitted hot path never copies W.
    Returns w_t of shape (L, D_pad), bf16.
    """
    D = C * H * W
    L = w_hwc.shape[1]
    w_chw = jnp.transpose(w_hwc.reshape(H, W, C, L), (2, 0, 1, 3)).reshape(D, L)
    w_t = (w_chw * (1.0 / 255.0)).astype(jnp.bfloat16).T        # (L, D)

    tk_eff = _effective_tk(D, tk)
    d_pad = pl.cdiv(D, tk_eff) * tk_eff
    if d_pad != D:
        # Zero columns contribute nothing to the logits.
        w_t = jnp.pad(w_t, ((0, 0), (0, d_pad - D)))
    return w_t


@functools.partial(jax.jit, static_argnames=("tk",))
def wm_tensor_detector(x_nchw, w_t_prepped, gt_bits, *, tk=TK_DEFAULT):
    """x_nchw: [B, C, H, W] f32; w_t_prepped: [L, D_pad] bf16 (from
    prepare_decoder_weights with the SAME tk); gt_bits: [1, L] f32.
    Detects the watermark on batch element 0 only (matches the module's
    `[0, :, :, :]` selection)."""
    B, C, H, W = x_nchw.shape
    D = C * H * W
    L, D_pad = w_t_prepped.shape

    tk_eff = _effective_tk(D, tk)
    assert D_pad % tk_eff == 0, (
        "w_t_prepped was prepared with a different tile size; re-run "
        "prepare_decoder_weights with the same tk.")
    num_k = D_pad // tk_eff

    # Batch 0, flattened in CHW order (W columns were pre-permuted to match).
    x_flat = x_nchw[0].reshape(1, D).astype(jnp.float32)
    if D_pad != D:
        # Cheap: x is tiny relative to W; W itself was padded at prep time.
        x_flat = jnp.pad(x_flat, ((0, 0), (0, D_pad - D)))

    # Memory-bound op: ~2*D*L bf16 bytes of W + 4*D bytes of x per call.
    cost = pl.CostEstimate(
        flops=2 * D_pad * L,
        transcendentals=0,
        bytes_accessed=2 * D_pad * L + 4 * D_pad + 4 * L + 2 * 4)

    return pl.pallas_call(
        _wm_detector_kernel,
        out_shape=jax.ShapeDtypeStruct((1, 2), jnp.int32),
        grid_spec=pltpu.PrefetchScalarGridSpec(
            num_scalar_prefetch=0,
            grid=(num_k,),
            in_specs=[
                pl.BlockSpec((1, tk_eff), lambda k: (0, k)),    # x slice, streamed
                pl.BlockSpec((L, tk_eff), lambda k: (0, k)),    # W^T slice, lane-dense stream
                pl.BlockSpec((1, L), lambda k: (0, 0)),         # gt, resident
            ],
            out_specs=pl.BlockSpec((1, 2), lambda k: (0, 0)),   # resident output
            scratch_shapes=[pltpu.VMEM((1, L), jnp.float32)],   # logit accumulator
        ),
        compiler_params=pltpu.CompilerParams(
            dimension_semantics=("arbitrary",)),                 # reduction axis
        cost_estimate=cost,
    )(x_flat, w_t_prepped, gt_bits.astype(jnp.float32))


if __name__ == "__main__":
    key = jax.random.PRNGKey(0)
    k_x, k_w, k_gt = jax.random.split(key, 3)

    # Small but multi-tile shape: D = 3*36*36 = 3888.  With a test tile of 1024
    # that is 4 reduction steps plus a zero-padded tail, exercising the
    # pl.when init / accumulate / epilogue phases and the padding path.
    B, C, H, W = 2, 3, 36, 36
    D = C * H * W
    TK_TEST = 1024

    # Deterministic example input (some values out of [0,1] to exercise the
    # clamp) and deterministic synthetic decoder weights / ground-truth bits.
    x = jax.random.uniform(k_x, (B, C, H, W), jnp.float32, -0.2, 1.2)
    w_hwc = jax.random.normal(k_w, (D, MSG_LEN), jnp.float32) * 0.1
    gt_bits = (jax.random.uniform(k_gt, (1, MSG_LEN)) > 0.5).astype(jnp.float32)

    w_t = prepare_decoder_weights(w_hwc, C, H, W, tk=TK_TEST)   # (L, D_pad) bf16

    out = wm_tensor_detector(x, w_t, gt_bits, tk=TK_TEST)
    out = jax.block_until_ready(out)

    # Shape / one-hot validity checks.
    assert out.shape == (1, 2) and out.dtype == jnp.int32
    assert int(out.sum()) == 1          # valid one-hot row
    assert int(out.min()) == 0 and int(out.max()) == 1

    # Pure-JAX reference using the same (bf16) weights and f32 accumulation.
    q_ref = jnp.floor(jnp.clip(x[0], 0.0, 1.0) * 255.0).reshape(1, D)
    w_ref = w_t[:, :D].astype(jnp.float32)                       # (L, D)
    logits_ref = q_ref @ w_ref.T                                 # (1, L)
    decoded_ref = (logits_ref > 0.0).astype(jnp.float32)
    bit_acc_ref = 1.0 - jnp.sum(jnp.abs(decoded_ref - gt_bits), axis=1) / MSG_LEN
    cls_ref = jnp.logical_or(bit_acc_ref > THRESHOLD,
                             bit_acc_ref < 1.0 - THRESHOLD).astype(jnp.int32)
    onehot_ref = jax.nn.one_hot(cls_ref, 2, dtype=jnp.int32)     # (1, 2)
    assert jnp.array_equal(out, onehot_ref), (out, onehot_ref)

    print("KERNEL_OK")
</pallas_src>

<mosaic_0001>
module attributes {stable_mosaic.version = 11 : i64} {
  func.func @_wm_detector_kernel(%arg0: i32, %arg1: memref<1x1024xf32, #tpu.memory_space<vmem>>, %arg2: memref<32x1024xbf16, #tpu.memory_space<vmem>>, %arg3: memref<1x32xf32, #tpu.memory_space<vmem>>, %arg4: memref<1x2xi32, #tpu.memory_space<vmem>>, %arg5: memref<1x32xf32, #tpu.memory_space<vmem>>) attributes {dimension_semantics = [#tpu.dimension_semantics<arbitrary>], iteration_bounds = array<i64: 4>, scalar_prefetch = 0 : i64, scratch_operands = 1 : i64, tpu.core_type = #tpu.core_type<tc>, window_params = [{transform_indices = @transform_0, window_bounds = array<i64: 1, 1024>}, {transform_indices = @transform_1, window_bounds = array<i64: 32, 1024>}, {pipeline_mode = #tpu.pipeline_mode<synchronous>, transform_indices = @transform_2, window_bounds = array<i64: 1, 32>}, {pipeline_mode = #tpu.pipeline_mode<synchronous>, transform_indices = @transform_3, window_bounds = array<i64: 1, 2>}]} {
    %c0_i32 = arith.constant 0 : i32
    %0 = arith.cmpi eq, %arg0, %c0_i32 : i32
    %1 = arith.extui %0 : i1 to i32
    %c0_i32_0 = arith.constant 0 : i32
    %2 = arith.cmpi ne, %1, %c0_i32_0 : i32
    scf.if %2 {
      %cst_12 = arith.constant 0.000000e+00 : f32
      %20 = vector.broadcast %cst_12 : f32 to vector<1x32xf32>
      %c0_13 = arith.constant 0 : index
      %c0_14 = arith.constant 0 : index
      %21 = vector.load %arg5[%c0_13, %c0_14] : memref<1x32xf32, #tpu.memory_space<vmem>>, vector<1x32xf32>
      tpu.vector_store %arg5[%c0_13, %c0_14], %20 {strides = array<i32>} : memref<1x32xf32, #tpu.memory_space<vmem>>, vector<1x32xf32>,
    } else {
    }
    %c0 = arith.constant 0 : index
    %c0_1 = arith.constant 0 : index
    %3 = vector.load %arg1[%c0, %c0_1] : memref<1x1024xf32, #tpu.memory_space<vmem>>, vector<1x1024xf32>
    %cst = arith.constant 0.000000e+00 : f32
    %cst_2 = arith.constant 1.000000e+00 : f32
    %4 = vector.broadcast %cst : f32 to vector<1x1024xf32>
    %5 = arith.maximumf %4, %3 : vector<1x1024xf32>
    %6 = vector.broadcast %cst_2 : f32 to vector<1x1024xf32>
    %7 = arith.minimumf %6, %5 : vector<1x1024xf32>
    %cst_3 = arith.constant 2.550000e+02 : f32
    %8 = vector.broadcast %cst_3 : f32 to vector<1x1024xf32>
    %9 = arith.mulf %7, %8 : vector<1x1024xf32>
    %10 = math.floor %9 : vector<1x1024xf32>
    %c0_4 = arith.constant 0 : index
    %c0_5 = arith.constant 0 : index
    %11 = vector.load %arg5[%c0_4, %c0_5] : memref<1x32xf32, #tpu.memory_space<vmem>>, vector<1x32xf32>
    %12 = arith.truncf %10 : vector<1x1024xf32> to vector<1x1024xbf16>
    %c0_6 = arith.constant 0 : index
    %c0_7 = arith.constant 0 : index
    %13 = vector.load %arg2[%c0_6, %c0_7] : memref<32x1024xbf16, #tpu.memory_space<vmem>>, vector<32x1024xbf16>
    %cst_8 = arith.constant dense<0.000000e+00> : vector<1x32xf32>
    %14 = tpu.matmul %12, %13, %cst_8 {dimension_numbers = #tpu.dot_dimension_numbers<[1], [1], [0], [0], [0, 0, 1, 0], [], []>} : vector<1x1024xbf16>, vector<32x1024xbf16>, vector<1x32xf32> -> vector<1x32xf32>
    %15 = arith.addf %11, %14 : vector<1x32xf32>
    %c0_9 = arith.constant 0 : index
    %c0_10 = arith.constant 0 : index
    %16 = vector.load %arg5[%c0_9, %c0_10] : memref<1x32xf32, #tpu.memory_space<vmem>>, vector<1x32xf32>
    tpu.vector_store %arg5[%c0_9, %c0_10], %15 {strides = array<i32>} : memref<1x32xf32, #tpu.memory_space<vmem>>, vector<1x32xf32>,
    %c3_i32 = arith.constant 3 : i32
    %17 = arith.cmpi eq, %arg0, %c3_i32 : i32
    %18 = arith.extui %17 : i1 to i32
    %c0_i32_11 = arith.constant 0 : i32
    %19 = arith.cmpi ne, %18, %c0_i32_11 : i32
    scf.if %19 {
      %c0_12 = arith.constant 0 : index
      %c0_13 = arith.constant 0 : index
      %20 = vector.load %arg5[%c0_12, %c0_13] : memref<1x32xf32, #tpu.memory_space<vmem>>, vector<1x32xf32>
      %cst_14 = arith.constant 0.000000e+00 : f32
      %21 = vector.broadcast %cst_14 : f32 to vector<1x32xf32>
      %22 = arith.cmpf ogt, %20, %21 : vector<1x32xf32>
      %23 = arith.extui %22 : vector<1x32xi1> to vector<1x32xi32>
      %24 = arith.sitofp %23 : vector<1x32xi32> to vector<1x32xf32>
      %c0_15 = arith.constant 0 : index
      %c0_16 = arith.constant 0 : index
      %25 = vector.load %arg3[%c0_15, %c0_16] : memref<1x32xf32, #tpu.memory_space<vmem>>, vector<1x32xf32>
      %26 = arith.subf %24, %25 : vector<1x32xf32>
      %27 = math.absf %26 : vector<1x32xf32>
      %cst_17 = arith.constant dense<0.000000e+00> : vector<1xf32>
      %28 = vector.multi_reduction <add>, %27, %cst_17 [1] : vector<1x32xf32> to vector<1xf32>
      %29 = vector.shape_cast %28 : vector<1xf32> to vector<1x1xf32>
      %cst_18 = arith.constant 3.200000e+01 : f32
      %30 = vector.broadcast %cst_18 : f32 to vector<1x1xf32>
      %31 = arith.divf %29, %30 : vector<1x1xf32>
      %cst_19 = arith.constant 1.000000e+00 : f32
      %32 = vector.broadcast %cst_19 : f32 to vector<1x1xf32>
      %33 = arith.subf %32, %31 : vector<1x1xf32>
      %cst_20 = arith.constant 8.000000e-01 : f32
      %34 = vector.broadcast %cst_20 : f32 to vector<1x1xf32>
      %35 = arith.cmpf ogt, %33, %34 : vector<1x1xf32>
      %cst_21 = arith.constant 2.000000e-01 : f32
      %36 = vector.broadcast %cst_21 : f32 to vector<1x1xf32>
      %37 = arith.cmpf olt, %33, %36 : vector<1x1xf32>
      %38 = arith.ori %35, %37 : vector<1x1xi1>
      %39 = arith.extui %38 : vector<1x1xi1> to vector<1x1xi32>
      %40 = tpu.iota {dimensions = array<i32: 1>} : vector<1x2xi32>
      %41 = vector.broadcast %39 : vector<1x1xi32> to vector<1x2xi32>
      %42 = arith.cmpi eq, %40, %41 : vector<1x2xi32>
      %43 = arith.extui %42 : vector<1x2xi1> to vector<1x2xi32>
      %c0_22 = arith.constant 0 : index
      %c0_23 = arith.constant 0 : index
      %44 = vector.load %arg4[%c0_22, %c0_23] : memref<1x2xi32, #tpu.memory_space<vmem>>, vector<1x2xi32>
      tpu.vector_store %arg4[%c0_22, %c0_23], %43 {strides = array<i32>} : memref<1x2xi32, #tpu.memory_space<vmem>>, vector<1x2xi32>,
    } else {
    }
    return
  }
  func.func @transform_0(%arg0: i32) -> (i32, i32) {
    %c0_i32 = arith.constant 0 : i32
    %c0_i32_0 = arith.constant 0 : i32
    return %c0_i32, %arg0 : i32, i32
  }
  func.func @transform_1(%arg0: i32) -> (i32, i32) {
    %c0_i32 = arith.constant 0 : i32
    %c0_i32_0 = arith.constant 0 : i32
    return %c0_i32, %arg0 : i32, i32
  }
  func.func @transform_2(%arg0: i32) -> (i32, i32) {
    %c0_i32 = arith.constant 0 : i32
    %c0_i32_0 = arith.constant 0 : i32
    %c0_i32_1 = arith.constant 0 : i32
    return %c0_i32, %c0_i32_0 : i32, i32
  }
  func.func @transform_3(%arg0: i32) -> (i32, i32) {
    %c0_i32 = arith.constant 0 : i32
    %c0_i32_0 = arith.constant 0 : i32
    %c0_i32_1 = arith.constant 0 : i32
    return %c0_i32, %c0_i32_0 : i32, i32
  }
}

</mosaic_0001>

<llo_original>
// kernel: squeeze.1
$region0: #{squeeze.1}
  %s0 = inlined_call_operand.vmem [shape: f32[3,36,36], index: 0, kind: input, shape index: {}]
  %s1 = inlined_call_operand.vmem [shape: f32[1,3888], index: 1, kind: output, shape index: {}]
  $region1: #{squeeze.1} parent=0
    #allocation0 [shape = 'u8[126976]{0}', space=vmem, size = 0x1f000, scoped, tag = 'scoped mem for output reshape']
    %v2 = vld [vmem:[%s0] sm:$0x1]
    %s3 = scalar_lea.vmem %s0, 31
    %v4 = vld [vmem:[%s3] sm:$0x2]
    %vm5 = vcmask 1041409
    %v6 = vsel %vm5, %v4, %v2
    %vm7 = vcmask 293888
    %8 = vst.msk [vmem:[#allocation0] ss:$72 sm:$0x3] %vm7, %v6
    %s9 = scalar_lea.vmem %s0, 68
    %s10 = smov 3
    %v11 = vld [vmem:[%s9] ss:$36 sm:%s10]
    %vm12 = vcmask 293888
    %s13 = scalar_lea.vmem [#allocation0], 144
    %14 = vst.msk [vmem:[%s13] ss:$72 sm:$0x3] %vm12, %v11
    %s15 = scalar_lea.vmem %s0, 75
    %s16 = smov 3
    %v17 = vld [vmem:[%s15] ss:$36 sm:%s16]
    %s18 = scalar_lea.vmem %s0, 4294967231
    %s19 = smov 12
    %v20 = vld [vmem:[%s18] ss:$36 sm:%s19]
    %vm21 = vcmask 1043458
    %v22 = vsel %vm21, %v20, %v17
    %s23 = scalar_lea.vmem %s0, 111
    %s24 = smov 3
    %v25 = vld [vmem:[%s23] ss:$-104 sm:%s24]
    %s26 = scalar_lea.vmem %s0, 41
    %v27 = vld [vmem:[%s26] sm:$0x4]
    %vm28 = vcmask 1042434
    %v29 = vsel %vm28, %v27, %v25
    %s30 = scalar_lea.vmem %s0, 72
    %v31 = vld [vmem:[%s30] sm:$0x8]
    %vm32 = vcmask 1043459
    %v33 = vsel %vm32, %v31, %v29
    %vm34 = vcmask 31744
    %v35 = vsel %vm34, %v33, %v22
    %36 = vrot.lane.b32.xlu0 %v35, 124
    %v37 = vpop.permute.xlu0 %36
    %vm38 = vcmask 261120
    %s39 = scalar_lea.vmem [#allocation0], 160
    %40 = vst.msk [vmem:[%s39] ss:$72 sm:$0x3] %vm38, %v37
    %s41 = scalar_lea.vmem [#allocation0], 4294967168
    %42 = vst.msk [vmem:[%s41] ss:$72 sm:$0xc] %vm38, %v37
    %vm43 = vcmask 1048544
    %s44 = scalar_lea.vmem [#allocation0], 224
    %45 = vst.msk [vmem:[%s44] ss:$-216 sm:$0x3] %vm43, %v37
    %s46 = scalar_lea.vmem [#allocation0], 4294967232
    %47 = vst.msk [vmem:[%s46] ss:$72 sm:$0xc] %vm43, %v37
    %s48 = scalar_lea.vmem %s0, 14
    %v49 = vld [vmem:[%s48] ss:$36 sm:$0x7]
    %s50 = scalar_lea.vmem %s0, 50
    %s51 = smov 3
    %v52 = vld [vmem:[%s50] ss:$36 sm:%s51]
    %s53 = scalar_lea.vmem %s0, 12
    %v54 = vld [vmem:[%s53] sm:$0x4]
    %vm55 = vcmask 1042434
    %v56 = vsel %vm55, %v54, %v52
    %vm57 = vcmask 64512
    %v58 = vsel %vm57, %v56, %v49
    %59 = vrot.lane.b32.xlu0 %v58, 120
    %v60 = vpop.permute.xlu0 %59
    %vm61 = vcmask 228352
    %s62 = scalar_lea.vmem [#allocation0], 32
    %63 = vst.msk [vmem:[%s62] ss:$72 sm:$0x7] %vm61, %v60
    %vm64 = vcmask 1048512
    %s65 = scalar_lea.vmem [#allocation0], 96
    %66 = vst.msk [vmem:[%s65] ss:$72 sm:$0x3] %vm64, %v60
    %s67 = scalar_lea.vmem [#allocation0], 22
    %68 = vst.msk [vmem:[%s67] sm:$0x4] %vm64, %v60
    %s69 = scalar_lea.vmem %s0, 93
    %s70 = smov 3
    %v71 = vld [vmem:[%s69] ss:$-72 sm:%s70]
    %s72 = scalar_lea.vmem %s0, 55
    %v73 = vld [vmem:[%s72] sm:$0x4]
    %vm74 = vcmask 1042434
    %v75 = vsel %vm74, %v73, %v71
    %s76 = scalar_lea.vmem %s0, 21
    %v77 = vld [vmem:[%s76] ss:$36 sm:$0x7]
    %vm78 = vcmask 97280
    %v79 = vsel %vm78, %v77, %v75
    %80 = vrot.lane.b32.xlu0 %v79, 116
    %v81 = vpop.permute.xlu0 %80
    %vm82 = vcmask 195584
    %s83 = scalar_lea.vmem [#allocation0], 192
    %84 = vst.msk [vmem:[%s83] ss:$-144 sm:$0x3] %vm82, %v81
    %s85 = scalar_lea.vmem [#allocation0], 118
    %86 = vst.msk [vmem:[%s85] sm:$0x4] %vm82, %v81
    %vm87 = vcmask 1048480
    %s88 = scalar_lea.vmem [#allocation0], 40
    %89 = vst.msk [vmem:[%s88] ss:$72 sm:$0x7] %vm87, %v81
    %s90 = scalar_lea.vmem %s0, 28
    %v91 = vld [vmem:[%s90] ss:$36 sm:$0x7]
    %s92 = scalar_lea.vmem %s0, 64
    %s93 = smov 3
    %v94 = vld [vmem:[%s92] ss:$36 sm:%s93]
    %s95 = scalar_lea.vmem %s0, 26
    %v96 = vld [vmem:[%s95] sm:$0x4]
    %vm97 = vcmask 1042434
    %v98 = vsel %vm97, %v96, %v94
    %vm99 = vcmask 130048
    %v100 = vsel %vm99, %v98, %v91
    %101 = vrot.lane.b32.xlu0 %v100, 112
    %v102 = vpop.permute.xlu0 %101
    %vm103 = vcmask 162816
    %s104 = scalar_lea.vmem [#allocation0], 64
    %105 = vst.msk [vmem:[%s104] ss:$72 sm:$0x7] %vm103, %v102
    %vm106 = vcmask 1048448
    %s107 = scalar_lea.vmem [#allocation0], 128
    %108 = vst.msk [vmem:[%s107] ss:$72 sm:$0x3] %vm106, %v102
    %s109 = scalar_lea.vmem [#allocation0], 54
    %110 = vst.msk [vmem:[%s109] sm:$0x4] %vm106, %v102
    %s111 = scalar_lea.vmem %s0, 107
    %s112 = smov 3
    %v113 = vld [vmem:[%s111] ss:$-104 sm:%s112]
    %s114 = scalar_lea.vmem %s0, 4294967259
    %s115 = smov 12
    %v116 = vld [vmem:[%s114] ss:$36 sm:%s115]
    %vm117 = vcmask 1043458
    %v118 = vsel %vm117, %v116, %v113
    %s119 = scalar_lea.vmem %s0, 3
    %v120 = vld [vmem:[%s119] sm:$0x1]
    %s121 = scalar_lea.vmem %s0, 4294967295
    %v122 = vld [vmem:[%s121] ss:$36 sm:$0xe]
    %vm123 = vcmask 1043457
    %v124 = vsel %vm123, %v122, %v120
    %vm125 = vcmask 162816
    %v126 = vsel %vm125, %v124, %v118
    %127 = vrot.lane.b32.xlu0 %v126, 108
    %v128 = vpop.permute.xlu0 %127
    %vm129 = vcmask 130048
    %s130 = scalar_lea.vmem [#allocation0], 224
    %131 = vst.msk [vmem:[%s130] ss:$-216 sm:$0x3] %vm129, %v128
    %s132 = scalar_lea.vmem [#allocation0], 4294967232
    %133 = vst.msk [vmem:[%s132] ss:$72 sm:$0xc] %vm129, %v128
    %vm134 = vcmask 1048416
    %135 = vst.msk [vmem:[#allocation0] ss:$72 sm:$0xf] %vm134, %v128
    %s136 = scalar_lea.vmem %s0, 46
    %s137 = smov 3
    %v138 = vld [vmem:[%s136] ss:$36 sm:%s137]
    %s139 = scalar_lea.vmem %s0, 322
    %s140 = smov 12
    %v141 = vld [vmem:[%s139] ss:$-104 sm:%s140]
    %vm142 = vcmask 1043458
    %v143 = vsel %vm142, %v141, %v138
    %s144 = scalar_lea.vmem %s0, 82
    %v145 = vld [vmem:[%s144] sm:$0x1]
    %s146 = scalar_lea.vmem %s0, 218
    %s147 = smov 6
    %v148 = vld [vmem:[%s146] ss:$-104 sm:%s147]
    %vm149 = vcmask 1042433
    %v150 = vsel %vm149, %v148, %v145
    %s151 = scalar_lea.vmem %s0, 43
    %v152 = vld [vmem:[%s151] sm:$0x8]
    %vm153 = vcmask 1043459
    %v154 = vsel %vm153, %v152, %v150
    %vm155 = vcmask 195584
    %v156 = vsel %vm155, %v154, %v143
    %157 = vrot.lane.b32.xlu0 %v156, 104
    %v158 = vpop.permute.xlu0 %157
    %vm159 = vcmask 97280
    %s160 = scalar_lea.vmem [#allocation0], 96
    %161 = vst.msk [vmem:[%s160] ss:$72 sm:$0x7] %vm159, %v158
    %s162 = scalar_lea.vmem [#allocation0], 21
    %163 = vst.msk [vmem:[%s162] sm:$0x8] %vm159, %v158
    %vm164 = vcmask 1048384
    %s165 = scalar_lea.vmem [#allocation0], 160
    %166 = vst.msk [vmem:[%s165] ss:$72 sm:$0x3] %vm164, %v158
    %s167 = scalar_lea.vmem [#allocation0], 4294967168
    %168 = vst.msk [vmem:[%s167] ss:$72 sm:$0xc] %vm164, %v158
    %s169 = scalar_lea.vmem %s0, 17
    %v170 = vld [vmem:[%s169] ss:$36 sm:$0x7]
    %s171 = scalar_lea.vmem %s0, 17
    %v172 = vld [vmem:[%s171] ss:$36 sm:$0x7]
    %vm173 = vcmask 228352
    %v174 = vsel %vm173, %v172, %v170
    %175 = vrot.lane.b32.xlu0 %v174, 100
    %v176 = vpop.permute.xlu0 %175
    %vm177 = vcmask 64512
    %s178 = scalar_lea.vmem [#allocation0], 40
    %179 = vst.msk [vmem:[%s178] ss:$72 sm:$0x7] %vm177, %v176
    %vm180 = vcmask 1048352
    %s181 = scalar_lea.vmem [#allocation0], 32
    %182 = vst.msk [vmem:[%s181] ss:$72 sm:$0x7] %vm180, %v176
    %s183 = scalar_lea.vmem %s0, 60
    %s184 = smov 3
    %v185 = vld [vmem:[%s183] ss:$36 sm:%s184]
    %s186 = scalar_lea.vmem %s0, 22
    %v187 = vld [vmem:[%s186] sm:$0x4]
    %vm188 = vcmask 1042434
    %v189 = vsel %vm188, %v187, %v185
    %s190 = scalar_lea.vmem %s0, 96
    %s191 = smov 3
    %v192 = vld [vmem:[%s190] ss:$-72 sm:%s191]
    %s193 = scalar_lea.vmem %s0, 58
    %v194 = vld [vmem:[%s193] sm:$0x4]
    %vm195 = vcmask 1042434
    %v196 = vsel %vm195, %v194, %v192
    %vm197 = vcmask 261120
    %v198 = vsel %vm197, %v196, %v189
    %199 = vrot.lane.b32.xlu0 %v198, 96
    %v200 = vpop.permute.xlu0 %199
    %vm201 = vcmask 31744
    %s202 = scalar_lea.vmem [#allocation0], 128
    %203 = vst.msk [vmem:[%s202] ss:$72 sm:$0x3] %vm201, %v200
    %s204 = scalar_lea.vmem [#allocation0], 54
    %205 = vst.msk [vmem:[%s204] sm:$0x4] %vm201, %v200
    %vm206 = vcmask 1048320
    %s207 = scalar_lea.vmem [#allocation0], 192
    %208 = vst.msk [vmem:[%s207] ss:$-144 sm:$0x3] %vm206, %v200
    %s209 = scalar_lea.vmem [#allocation0], 118
    %210 = vst.msk [vmem:[%s209] sm:$0x4] %vm206, %v200
    %s211 = scalar_lea.vmem %s0, 31
    %v212 = vld [vmem:[%s211] ss:$36 sm:$0x7]
    %213 = vrot.lane.b32.xlu0 %v212, 92
    %v214 = vpop.permute.xlu0 %213
    %vm215 = vcmask 1048288
    %s216 = scalar_lea.vmem [#allocation0], 64
    %217 = vst.msk [vmem:[%s216] ss:$72 sm:$0x7] %vm215, %v214
    %s218 = scalar_lea.vmem %s0, 110
    %s219 = smov 3
    %v220 = vld [vmem:[%s218] ss:$-104 sm:%s219]
    %s221 = scalar_lea.vmem %s0, 40
    %v222 = vld [vmem:[%s221] sm:$0x4]
    %vm223 = vcmask 1042434
    %v224 = vsel %vm223, %v222, %v220
    %s225 = scalar_lea.vmem %s0, 71
    %v226 = vld [vmem:[%s225] sm:$0x8]
    %vm227 = vcmask 1043459
    %v228 = vsel %vm227, %v226, %v224
    %229 = vrot.lane.b32.xlu0 %v228, 88
    %v230 = vpop.permute.xlu0 %229
    %vm231 = vcmask 1015488
    %s232 = scalar_lea.vmem [#allocation0], 224
    %233 = vst.msk [vmem:[%s232] ss:$-216 sm:$0x3] %vm231, %v230
    %s234 = scalar_lea.vmem [#allocation0], 4294967232
    %235 = vst.msk [vmem:[%s234] ss:$72 sm:$0xc] %vm231, %v230
    %s236 = scalar_lea.vmem %s0, 49
    %s237 = smov 3
    %v238 = vld [vmem:[%s236] ss:$36 sm:%s237]
    %s239 = scalar_lea.vmem %s0, 11
    %v240 = vld [vmem:[%s239] sm:$0x4]
    %vm241 = vcmask 1042434
    %v242 = vsel %vm241, %v240, %v238
    %243 = vrot.lane.b32.xlu0 %v242, 84
    %v244 = vpop.permute.xlu0 %243
    %vm245 = vcmask 982688
    %s246 = scalar_lea.vmem [#allocation0], 96
    %247 = vst.msk [vmem:[%s246] ss:$72 sm:$0x3] %vm245, %v244
    %s248 = scalar_lea.vmem [#allocation0], 22
    %249 = vst.msk [vmem:[%s248] sm:$0x4] %vm245, %v244
    %s250 = scalar_lea.vmem %s0, 20
    %v251 = vld [vmem:[%s250] ss:$36 sm:$0x7]
    %252 = vrot.lane.b32.xlu0 %v251, 80
    %v253 = vpop.permute.xlu0 %252
    %vm254 = vcmask 949888
    %s255 = scalar_lea.vmem [#allocation0], 40
    %256 = vst.msk [vmem:[%s255] ss:$72 sm:$0x7] %vm254, %v253
    %s257 = scalar_lea.vmem %s0, 63
    %s258 = smov 3
    %v259 = vld [vmem:[%s257] ss:$36 sm:%s258]
    %s260 = scalar_lea.vmem %s0, 25
    %v261 = vld [vmem:[%s260] sm:$0x4]
    %vm262 = vcmask 1042434
    %v263 = vsel %vm262, %v261, %v259
    %264 = vrot.lane.b32.xlu0 %v263, 76
    %v265 = vpop.permute.xlu0 %264
    %vm266 = vcmask 917088
    %s267 = scalar_lea.vmem [#allocation0], 128
    %268 = vst.msk [vmem:[%s267] ss:$72 sm:$0x3] %vm266, %v265
    %s269 = scalar_lea.vmem [#allocation0], 54
    %270 = vst.msk [vmem:[%s269] sm:$0x4] %vm266, %v265
    %s271 = scalar_lea.vmem %s0, 2
    %v272 = vld [vmem:[%s271] sm:$0x1]
    %s273 = scalar_lea.vmem %s0, 4294967294
    %v274 = vld [vmem:[%s273] ss:$36 sm:$0xe]
    %vm275 = vcmask 1043457
    %v276 = vsel %vm275, %v274, %v272
    %277 = vrot.lane.b32.xlu0 %v276, 72
    %v278 = vpop.permute.xlu0 %277
    %vm279 = vcmask 884288
    %280 = vst.msk [vmem:[#allocation0] ss:$72 sm:$0xf] %vm279, %v278
    %s281 = scalar_lea.vmem %s0, 81
    %v282 = vld [vmem:[%s281] sm:$0x1]
    %s283 = scalar_lea.vmem %s0, 217
    %s284 = smov 6
    %v285 = vld [vmem:[%s283] ss:$-104 sm:%s284]
    %vm286 = vcmask 1042433
    %v287 = vsel %vm286, %v285, %v282
    %s288 = scalar_lea.vmem %s0, 42
    %v289 = vld [vmem:[%s288] sm:$0x8]
    %vm290 = vcmask 1043459
    %v291 = vsel %vm290, %v289, %v287
    %292 = vrot.lane.b32.xlu0 %v291, 68
    %v293 = vpop.permute.xlu0 %292
    %vm294 = vcmask 851488
    %s295 = scalar_lea.vmem [#allocation0], 160
    %296 = vst.msk [vmem:[%s295] ss:$72 sm:$0x3] %vm294, %v293
    %s297 = scalar_lea.vmem [#allocation0], 4294967168
    %298 = vst.msk [vmem:[%s297] ss:$72 sm:$0xc] %vm294, %v293
    %s299 = scalar_lea.vmem %s0, 16
    %v300 = vld [vmem:[%s299] ss:$36 sm:$0x7]
    %301 = vrot.lane.b32.xlu0 %v300, 64
    %v302 = vpop.permute.xlu0 %301
    %vm303 = vcmask 818688
    %s304 = scalar_lea.vmem [#allocation0], 32
    %305 = vst.msk [vmem:[%s304] ss:$72 sm:$0x7] %vm303, %v302
    %s306 = scalar_lea.vmem %s0, 95
    %s307 = smov 3
    %v308 = vld [vmem:[%s306] ss:$-72 sm:%s307]
    %s309 = scalar_lea.vmem %s0, 57
    %v310 = vld [vmem:[%s309] sm:$0x4]
    %vm311 = vcmask 1042434
    %v312 = vsel %vm311, %v310, %v308
    %313 = vrot.lane.b32.xlu0 %v312, 60
    %v314 = vpop.permute.xlu0 %313
    %vm315 = vcmask 785888
    %s316 = scalar_lea.vmem [#allocation0], 192
    %317 = vst.msk [vmem:[%s316] ss:$-144 sm:$0x3] %vm315, %v314
    %s318 = scalar_lea.vmem [#allocation0], 118
    %319 = vst.msk [vmem:[%s318] sm:$0x4] %vm315, %v314
    %s320 = scalar_lea.vmem %s0, 30
    %v321 = vld [vmem:[%s320] ss:$36 sm:$0x7]
    %322 = vrot.lane.b32.xlu0 %v321, 56
    %v323 = vpop.permute.xlu0 %322
    %vm324 = vcmask 753088
    %s325 = scalar_lea.vmem [#allocation0], 64
    %326 = vst.msk [vmem:[%s325] ss:$72 sm:$0x7] %vm324, %v323
    %s327 = scalar_lea.vmem %s0, 109
    %s328 = smov 3
    %v329 = vld [vmem:[%s327] ss:$-104 sm:%s328]
    %s330 = scalar_lea.vmem %s0, 39
    %v331 = vld [vmem:[%s330] sm:$0x4]
    %vm332 = vcmask 1042434
    %v333 = vsel %vm332, %v331, %v329
    %s334 = scalar_lea.vmem %s0, 70
    %v335 = vld [vmem:[%s334] sm:$0x8]
    %vm336 = vcmask 1043459
    %v337 = vsel %vm336, %v335, %v333
    %338 = vrot.lane.b32.xlu0 %v337, 52
    %v339 = vpop.permute.xlu0 %338
    %vm340 = vcmask 720288
    %s341 = scalar_lea.vmem [#allocation0], 224
    %342 = vst.msk [vmem:[%s341] ss:$-216 sm:$0x3] %vm340, %v339
    %s343 = scalar_lea.vmem [#allocation0], 4294967232
    %344 = vst.msk [vmem:[%s343] ss:$72 sm:$0xc] %vm340, %v339
    %s345 = scalar_lea.vmem %s0, 48
    %s346 = smov 3
    %v347 = vld [vmem:[%s345] ss:$36 sm:%s346]
    %s348 = scalar_lea.vmem %s0, 10
    %v349 = vld [vmem:[%s348] sm:$0x4]
    %vm350 = vcmask 1042434
    %v351 = vsel %vm350, %v349, %v347
    %352 = vrot.lane.b32.xlu0 %v351, 48
    %v353 = vpop.permute.xlu0 %352
    %vm354 = vcmask 687488
    %s355 = scalar_lea.vmem [#allocation0], 96
    %356 = vst.msk [vmem:[%s355] ss:$72 sm:$0x3] %vm354, %v353
    %s357 = scalar_lea.vmem [#allocation0], 22
    %358 = vst.msk [vmem:[%s357] sm:$0x4] %vm354, %v353
    %s359 = scalar_lea.vmem %s0, 19
    %v360 = vld [vmem:[%s359] ss:$36 sm:$0x7]
    %361 = vrot.lane.b32.xlu0 %v360, 44
    %v362 = vpop.permute.xlu0 %361
    %vm363 = vcmask 654688
    %s364 = scalar_lea.vmem [#allocation0], 40
    %365 = vst.msk [vmem:[%s364] ss:$72 sm:$0x7] %vm363, %v362
    %s366 = scalar_lea.vmem %s0, 62
    %s367 = smov 3
    %v368 = vld [vmem:[%s366] ss:$36 sm:%s367]
    %s369 = scalar_lea.vmem %s0, 24
    %v370 = vld [vmem:[%s369] sm:$0x4]
    %vm371 = vcmask 1042434
    %v372 = vsel %vm371, %v370, %v368
    %373 = vrot.lane.b32.xlu0 %v372, 40
    %v374 = vpop.permute.xlu0 %373
    %vm375 = vcmask 621888
    %s376 = scalar_lea.vmem [#allocation0], 128
    %377 = vst.msk [vmem:[%s376] ss:$72 sm:$0x3] %vm375, %v374
    %s378 = scalar_lea.vmem [#allocation0], 54
    %379 = vst.msk [vmem:[%s378] sm:$0x4] %vm375, %v374
    %s380 = scalar_lea.vmem %s0, 1
    %v381 = vld [vmem:[%s380] sm:$0x1]
    %s382 = scalar_lea.vmem %s0, 4294967293
    %v383 = vld [vmem:[%s382] ss:$36 sm:$0xe]
    %vm384 = vcmask 1043457
    %v385 = vsel %vm384, %v383, %v381
    %386 = vrot.lane.b32.xlu0 %v385, 36
    %v387 = vpop.permute.xlu0 %386
    %vm388 = vcmask 589088
    %389 = vst.msk [vmem:[#allocation0] ss:$72 sm:$0xf] %vm388, %v387
    %s390 = scalar_lea.vmem %s0, 80
    %v391 = vld [vmem:[%s390] sm:$0x1]
    %s392 = scalar_lea.vmem %s0, 216
    %s393 = smov 6
    %v394 = vld [vmem:[%s392] ss:$-104 sm:%s393]
    %vm395 = vcmask 1042433
    %v396 = vsel %vm395, %v394, %v391
    %s397 = scalar_lea.vmem %s0, 41
    %v398 = vld [vmem:[%s397] sm:$0x8]
    %vm399 = vcmask 1043459
    %v400 = vsel %vm399, %v398, %v396
    %401 = vrot.lane.b32.xlu0 %v400, 32
    %v402 = vpop.permute.xlu0 %401
    %vm403 = vcmask 556288
    %s404 = scalar_lea.vmem [#allocation0], 160
    %405 = vst.msk [vmem:[%s404] ss:$72 sm:$0x3] %vm403, %v402
    %s406 = scalar_lea.vmem [#allocation0], 4294967168
    %407 = vst.msk [vmem:[%s406] ss:$72 sm:$0xc] %vm403, %v402
    %s408 = scalar_lea.vmem %s0, 15
    %v409 = vld [vmem:[%s408] ss:$36 sm:$0x7]
    %410 = vrot.lane.b32.xlu0 %v409, 28
    %v411 = vpop.permute.xlu0 %410
    %vm412 = vcmask 523488
    %s413 = scalar_lea.vmem [#allocation0], 32
    %414 = vst.msk [vmem:[%s413] ss:$72 sm:$0x7] %vm412, %v411
    %s415 = scalar_lea.vmem %s0, 94
    %s416 = smov 3
    %v417 = vld [vmem:[%s415] ss:$-72 sm:%s416]
    %s418 = scalar_lea.vmem %s0, 56
    %v419 = vld [vmem:[%s418] sm:$0x4]
    %vm420 = vcmask 1042434
    %v421 = vsel %vm420, %v419, %v417
    %422 = vrot.lane.b32.xlu0 %v421, 24
    %v423 = vpop.permute.xlu0 %422
    %vm424 = vcmask 490688
    %s425 = scalar_lea.vmem [#allocation0], 192
    %426 = vst.msk [vmem:[%s425] ss:$-144 sm:$0x3] %vm424, %v423
    %s427 = scalar_lea.vmem [#allocation0], 118
    %428 = vst.msk [vmem:[%s427] sm:$0x4] %vm424, %v423
    %s429 = scalar_lea.vmem %s0, 29
    %v430 = vld [vmem:[%s429] ss:$36 sm:$0x7]
    %431 = vrot.lane.b32.xlu0 %v430, 20
    %v432 = vpop.permute.xlu0 %431
    %vm433 = vcmask 457888
    %s434 = scalar_lea.vmem [#allocation0], 64
    %435 = vst.msk [vmem:[%s434] ss:$72 sm:$0x7] %vm433, %v432
    %s436 = scalar_lea.vmem %s0, 108
    %s437 = smov 3
    %v438 = vld [vmem:[%s436] ss:$-104 sm:%s437]
    %s439 = scalar_lea.vmem %s0, 38
    %v440 = vld [vmem:[%s439] sm:$0x4]
    %vm441 = vcmask 1042434
    %v442 = vsel %vm441, %v440, %v438
    %s443 = scalar_lea.vmem %s0, 69
    %v444 = vld [vmem:[%s443] sm:$0x8]
    %vm445 = vcmask 1043459
    %v446 = vsel %vm445, %v444, %v442
    %447 = vrot.lane.b32.xlu0 %v446, 16
    %v448 = vpop.permute.xlu0 %447
    %vm449 = vcmask 425088
    %s450 = scalar_lea.vmem [#allocation0], 224
    %451 = vst.msk [vmem:[%s450] ss:$-216 sm:$0x3] %vm449, %v448
    %s452 = scalar_lea.vmem [#allocation0], 4294967232
    %453 = vst.msk [vmem:[%s452] ss:$72 sm:$0xc] %vm449, %v448
    %s454 = scalar_lea.vmem %s0, 47
    %s455 = smov 3
    %v456 = vld [vmem:[%s454] ss:$36 sm:%s455]
    %s457 = scalar_lea.vmem %s0, 323
    %s458 = smov 12
    %v459 = vld [vmem:[%s457] ss:$-104 sm:%s458]
    %vm460 = vcmask 1043458
    %v461 = vsel %vm460, %v459, %v456
    %462 = vrot.lane.b32.xlu0 %v461, 12
    %v463 = vpop.permute.xlu0 %462
    %vm464 = vcmask 392288
    %s465 = scalar_lea.vmem [#allocation0], 96
    %466 = vst.msk [vmem:[%s465] ss:$72 sm:$0x7] %vm464, %v463
    %s467 = scalar_lea.vmem [#allocation0], 21
    %468 = vst.msk [vmem:[%s467] sm:$0x8] %vm464, %v463
    %s469 = scalar_lea.vmem %s0, 18
    %v470 = vld [vmem:[%s469] ss:$36 sm:$0x7]
    %471 = vrot.lane.b32.xlu0 %v470, 8
    %v472 = vpop.permute.xlu0 %471
    %vm473 = vcmask 359488
    %s474 = scalar_lea.vmem [#allocation0], 40
    %475 = vst.msk [vmem:[%s474] ss:$72 sm:$0x7] %vm473, %v472
    %s476 = scalar_lea.vmem %s0, 61
    %s477 = smov 3
    %v478 = vld [vmem:[%s476] ss:$36 sm:%s477]
    %s479 = scalar_lea.vmem %s0, 23
    %v480 = vld [vmem:[%s479] sm:$0x4]
    %vm481 = vcmask 1042434
    %v482 = vsel %vm481, %v480, %v478
    %483 = vrot.lane.b32.xlu0 %v482, 4
    %v484 = vpop.permute.xlu0 %483
    %vm485 = vcmask 326688
    %s486 = scalar_lea.vmem [#allocation0], 128
    %487 = vst.msk [vmem:[%s486] ss:$72 sm:$0x3] %vm485, %v484
    %s488 = scalar_lea.vmem [#allocation0], 54
    %489 = vst.msk [vmem:[%s488] sm:$0x4] %vm485, %v484
    %s491 = ssub.s32 2, 1
    %v492 = vld [vmem:[#allocation0] sm:%s491]
    %s494 = ssub.s32 2, 1
    %495 = vst [vmem:[%s1] sm:%s494] %v492
    %s496 = scalar_lea.vmem [#allocation0], 8
    %v497 = vld [vmem:[%s496] sm:%s491]
    %s499 = ssub.s32 2, 1
    %s500 = scalar_lea.vmem %s1, 1
    %501 = vst [vmem:[%s500] sm:%s499] %v497
    %s502 = scalar_lea.vmem [#allocation0], 16
    %v503 = vld [vmem:[%s502] sm:%s491]
    %s505 = ssub.s32 2, 1
    %s506 = scalar_lea.vmem %s1, 2
    %507 = vst [vmem:[%s506] sm:%s505] %v503
    %s508 = scalar_lea.vmem [#allocation0], 24
    %v509 = vld [vmem:[%s508] sm:%s491]
    %s511 = ssub.s32 2, 1
    %s512 = scalar_lea.vmem %s1, 3
    %513 = vst [vmem:[%s512] sm:%s511] %v509
    %s514 = scalar_lea.vmem [#allocation0], 32
    %v515 = vld [vmem:[%s514] sm:%s491]
    %s517 = ssub.s32 2, 1
    %s518 = scalar_lea.vmem %s1, 4
    %519 = vst [vmem:[%s518] sm:%s517] %v515
    %s520 = scalar_lea.vmem [#allocation0], 40
    %v521 = vld [vmem:[%s520] sm:%s491]
    %s523 = ssub.s32 2, 1
    %s524 = scalar_lea.vmem %s1, 5
    %525 = vst [vmem:[%s524] sm:%s523] %v521
    %s526 = scalar_lea.vmem [#allocation0], 48
    %v527 = vld [vmem:[%s526] sm:%s491]
    %s529 = ssub.s32 2, 1
    %s530 = scalar_lea.vmem %s1, 6
    %531 = vst [vmem:[%s530] sm:%s529] %v527
    %s532 = scalar_lea.vmem [#allocation0], 56
    %v533 = vld [vmem:[%s532] sm:%s491]
    %s535 = ssub.s32 2, 1
    %s536 = scalar_lea.vmem %s1, 7
    %537 = vst [vmem:[%s536] sm:%s535] %v533
    %s538 = scalar_lea.vmem [#allocation0], 64
    %v539 = vld [vmem:[%s538] sm:%s491]
    %s541 = ssub.s32 2, 1
    %s542 = scalar_lea.vmem %s1, 8
    %543 = vst [vmem:[%s542] sm:%s541] %v539
    %s544 = scalar_lea.vmem [#allocation0], 72
    %v545 = vld [vmem:[%s544] sm:%s491]
    %s547 = ssub.s32 2, 1
    %s548 = scalar_lea.vmem %s1, 9
    %549 = vst [vmem:[%s548] sm:%s547] %v545
    %s550 = scalar_lea.vmem [#allocation0], 80
    %v551 = vld [vmem:[%s550] sm:%s491]
    %s553 = ssub.s32 2, 1
    %s554 = scalar_lea.vmem %s1, 10
    %555 = vst [vmem:[%s554] sm:%s553] %v551
    %s556 = scalar_lea.vmem [#allocation0], 88
    %v557 = vld [vmem:[%s556] sm:%s491]
    %s559 = ssub.s32 2, 1
    %s560 = scalar_lea.vmem %s1, 11
    %561 = vst [vmem:[%s560] sm:%s559] %v557
    %s562 = scalar_lea.vmem [#allocation0], 96
    %v563 = vld [vmem:[%s562] sm:%s491]
    %s565 = ssub.s32 2, 1
    %s566 = scalar_lea.vmem %s1, 12
    %567 = vst [vmem:[%s566] sm:%s565] %v563
    %s568 = scalar_lea.vmem [#allocation0], 104
    %v569 = vld [vmem:[%s568] sm:%s491]
    %s571 = ssub.s32 2, 1
    %s572 = scalar_lea.vmem %s1, 13
    %573 = vst [vmem:[%s572] sm:%s571] %v569
    %s574 = scalar_lea.vmem [#allocation0], 112
    %v575 = vld [vmem:[%s574] sm:%s491]
    %s577 = ssub.s32 2, 1
    %s578 = scalar_lea.vmem %s1, 14
    %579 = vst [vmem:[%s578] sm:%s577] %v575
    %s580 = scalar_lea.vmem [#allocation0], 120
    %v581 = vld [vmem:[%s580] sm:%s491]
    %s583 = ssub.s32 2, 1
    %s584 = scalar_lea.vmem %s1, 15
    %585 = vst [vmem:[%s584] sm:%s583] %v581
    %s586 = scalar_lea.vmem [#allocation0], 128
    %v587 = vld [vmem:[%s586] sm:%s491]
    %s589 = ssub.s32 2, 1
    %s590 = scalar_lea.vmem %s1, 16
    %591 = vst [vmem:[%s590] sm:%s589] %v587
    %s592 = scalar_lea.vmem [#allocation0], 136
    %v593 = vld [vmem:[%s592] sm:%s491]
    %s595 = ssub.s32 2, 1
    %s596 = scalar_lea.vmem %s1, 17
    %597 = vst [vmem:[%s596] sm:%s595] %v593
    %s598 = scalar_lea.vmem [#allocation0], 144
    %v599 = vld [vmem:[%s598] sm:%s491]
    %s601 = ssub.s32 2, 1
    %s602 = scalar_lea.vmem %s1, 18
    %603 = vst [vmem:[%s602] sm:%s601] %v599
    %s604 = scalar_lea.vmem [#allocation0], 152
    %v605 = vld [vmem:[%s604] sm:%s491]
    %s607 = ssub.s32 2, 1
    %s608 = scalar_lea.vmem %s1, 19
    %609 = vst [vmem:[%s608] sm:%s607] %v605
    %s610 = scalar_lea.vmem [#allocation0], 160
    %v611 = vld [vmem:[%s610] sm:%s491]
    %s613 = ssub.s32 2, 1
    %s614 = scalar_lea.vmem %s1, 20
    %615 = vst [vmem:[%s614] sm:%s613] %v611
    %s616 = scalar_lea.vmem [#allocation0], 168
    %v617 = vld [vmem:[%s616] sm:%s491]
    %s619 = ssub.s32 2, 1
    %s620 = scalar_lea.vmem %s1, 21
    %621 = vst [vmem:[%s620] sm:%s619] %v617
    %s622 = scalar_lea.vmem [#allocation0], 176
    %v623 = vld [vmem:[%s622] sm:%s491]
    %s625 = ssub.s32 2, 1
    %s626 = scalar_lea.vmem %s1, 22
    %627 = vst [vmem:[%s626] sm:%s625] %v623
    %s628 = scalar_lea.vmem [#allocation0], 184
    %v629 = vld [vmem:[%s628] sm:%s491]
    %s631 = ssub.s32 2, 1
    %s632 = scalar_lea.vmem %s1, 23
    %633 = vst [vmem:[%s632] sm:%s631] %v629
    %s634 = scalar_lea.vmem [#allocation0], 192
    %v635 = vld [vmem:[%s634] sm:%s491]
    %s637 = ssub.s32 2, 1
    %s638 = scalar_lea.vmem %s1, 24
    %639 = vst [vmem:[%s638] sm:%s637] %v635
    %s640 = scalar_lea.vmem [#allocation0], 200
    %v641 = vld [vmem:[%s640] sm:%s491]
    %s643 = ssub.s32 2, 1
    %s644 = scalar_lea.vmem %s1, 25
    %645 = vst [vmem:[%s644] sm:%s643] %v641
    %s646 = scalar_lea.vmem [#allocation0], 208
    %v647 = vld [vmem:[%s646] sm:%s491]
    %s649 = ssub.s32 2, 1
    %s650 = scalar_lea.vmem %s1, 26
    %651 = vst [vmem:[%s650] sm:%s649] %v647
    %s652 = scalar_lea.vmem [#allocation0], 216
    %v653 = vld [vmem:[%s652] sm:%s491]
    %s655 = ssub.s32 2, 1
    %s656 = scalar_lea.vmem %s1, 27
    %657 = vst [vmem:[%s656] sm:%s655] %v653
    %s658 = scalar_lea.vmem [#allocation0], 224
    %v659 = vld [vmem:[%s658] sm:%s491]
    %s661 = ssub.s32 2, 1
    %s662 = scalar_lea.vmem %s1, 28
    %663 = vst [vmem:[%s662] sm:%s661] %v659
    %s664 = scalar_lea.vmem [#allocation0], 232
    %v665 = vld [vmem:[%s664] sm:%s491]
    %s667 = ssub.s32 2, 1
    %s668 = scalar_lea.vmem %s1, 29
    %669 = vst [vmem:[%s668] sm:%s667] %v665
    %s670 = scalar_lea.vmem [#allocation0], 240
    %v671 = vld [vmem:[%s670] sm:%s491]
    %s673 = ssub.s32 2, 1
    %s674 = scalar_lea.vmem %s1, 30
    %675 = vst [vmem:[%s674] sm:%s673] %v671

// kernel: wm_tensor_detector.1
$region0: #{wm_tensor_detector.1}
  #allocation0 [shape = 'u32[]', space=smem, size = 0x4, offset = 0x4, fixed_abs, tag = 'smem constant byte address 0x4 - core index']
  #allocation1 [shape = 'u32[72,128]{1,0:T(1,128)}', space=vmem, size = 0x9000, scoped, tag = 'internal scratch']
  #allocation2 [shape = 'f32[1,32]{1,0:T(1,128)}', space=vmem, size = 0x200, scoped, tag = 'scratch operand']
  %s0 = inlined_call_operand.vmem [shape: f32[1,4096], index: 0, kind: input, shape index: {}]
  %s1 = inlined_call_operand.hbm [shape: bf16[32,4096], index: 1, kind: input, shape index: {}]
  %s2 = inlined_call_operand.vmem [shape: f32[1,32], index: 2, kind: input, shape index: {}]
  %s3 = inlined_call_operand.hbm [shape: s32[1,2], index: 3, kind: output, shape index: {}]
  %s4 = sld [smem:[#allocation0]]
  $region57: #{wm_tensor_detector.1} parent=0
    _
  %s6 = ssub.s32 1, %s4
  %s7 = scalar_select 0, %s6, %s4
  $region1: #{wm_tensor_detector.1} parent=0
    #allocation3 [shape = 'u8[131072]{0}', space=vmem, size = 0x20000, scoped, tag = 'input window, operand 1']
    #allocation4 [shape = 's32[2]{0}', space=sflag, size = 0x8, scoped, tag = 'scoped memory for wm_tensor_detector.1']
    #allocation5 [shape = 's32[2]{0}', space=sflag, size = 0x8, scoped, tag = 'scoped memory for wm_tensor_detector.1']
    #allocation6 [shape = 'u8[512]{0}', space=vmem, size = 0x400, scoped, tag = 'output window, operand 0, single buffered']
    %8 = vsyncpa [#allocation4], 0
    %s9 = scalar_lea.sflag [#allocation4], 1
    %10 = vsyncpa %s9, 0
    %11 = vsyncpa [#allocation5], 0
    loop: start=0, step=1, limit=6
    $region2: #{wm_tensor_detector.1} parent=1 // loop_pre_header
      _
    $region3: #{wm_tensor_detector.1} parent=1 // loop_header
      %s13 = sphi 0, %s17
      %p14 = scmp.ge.s32.totalorder %s13, 6
      %s23 = sphi 0, %s25
      %s26 = sphi 0, %s23
      %s27 = sphi 0, %s26
      %s43 = sphi 0, %s27
      %s49 = sphi 0, %s51
      %s52 = sphi 0, %s49
      %s53 = sphi 0, %s52
      %s69 = sphi 0, %s53
      %s73 = sphi 0, %s73
      %s75 = sphi 0, %s73
      %s76 = sphi 0, %s75
      %s90 = sphi 0, %s76
      %s94 = sphi 0, %s94
      %s96 = sphi 0, %s94
      %s97 = sphi 0, %s96
      %s111 = sphi 0, %s97
    $region4: #{wm_tensor_detector.1} parent=1 // loop_header_branch
      %16 = sbr.rel (%p14) target = $region8
    $region5: #{wm_tensor_detector.1} parent=1 // loop_body
      %s18 = ssub.s32 %s13, 1
      %s19 = ssub.s32 %s13, 2
      %s20 = sadd.s32 %s13, 1
      %s21 = ssub.s32 %s13, %s20
      %p22 = scmp.eq.s32.totalorder %s21, 0
      %s24 = sadd.s32 %s23, 1
      %s25 = scalar_select %p22, %s23, %s24
      %p28 = pneg %p22
      %p29 = scmp.eq.s32.totalorder %s13, 3
      %p30 = por %p28, %p29
      %p31 = scmp.ne.s32.totalorder %s23, %s26
      %p32 = scmp.eq.s32.totalorder %s13, 0
      %p33 = por %p31, %p32
      %p34 = scmp.ne.s32.totalorder %s23, %s26
      %p35 = scmp.eq.s32.totalorder %s18, 3
      %p36 = por %p34, %p35
      %p37 = scmp.ne.s32.totalorder %s26, %s27
      %p38 = scmp.eq.s32.totalorder %s18, 0
      %p39 = por %p37, %p38
      %p40 = scmp.ne.s32.totalorder %s26, %s27
      %p41 = scmp.eq.s32.totalorder %s19, 3
      %p42 = por %p40, %p41
      %p44 = scmp.ne.s32.totalorder %s27, %s43
      %p45 = scmp.eq.s32.totalorder %s19, 0
      %p46 = por %p44, %p45
      %s47 = ssub.s32 %s13, %s20
      %p48 = scmp.eq.s32.totalorder %s47, 0
      %s50 = sadd.s32 %s49, 1
      %s51 = scalar_select %p48, %s49, %s50
      %p54 = pneg %p48
      %p55 = scmp.eq.s32.totalorder %s13, 3
      %p56 = por %p54, %p55
      %p57 = scmp.ne.s32.totalorder %s49, %s52
      %p58 = scmp.eq.s32.totalorder %s13, 0
      %p59 = por %p57, %p58
      %p60 = scmp.ne.s32.totalorder %s49, %s52
      %p61 = scmp.eq.s32.totalorder %s18, 3
      %p62 = por %p60, %p61
      %p63 = scmp.ne.s32.totalorder %s52, %s53
      %p64 = scmp.eq.s32.totalorder %s18, 0
      %p65 = por %p63, %p64
      %p66 = scmp.ne.s32.totalorder %s52, %s53
      %p67 = scmp.eq.s32.totalorder %s19, 3
      %p68 = por %p66, %p67
      %p70 = scmp.ne.s32.totalorder %s53, %s69
      %p71 = scmp.eq.s32.totalorder %s19, 0
      %p72 = por %p70, %p71
      %s74 = sadd.s32 %s73, 1
      %p77 = scmp.eq.s32.totalorder %s13, 3
      %p78 = scmp.ne.s32.totalorder %s73, %s75
      %p79 = scmp.eq.s32.totalorder %s13, 0
      %p80 = por %p78, %p79
      %p81 = scmp.ne.s32.totalorder %s73, %s75
      %p82 = scmp.eq.s32.totalorder %s18, 3
      %p83 = por %p81, %p82
      %p84 = scmp.ne.s32.totalorder %s75, %s76
      %p85 = scmp.eq.s32.totalorder %s18, 0
      %p86 = por %p84, %p85
      %p87 = scmp.ne.s32.totalorder %s75, %s76
      %p88 = scmp.eq.s32.totalorder %s19, 3
      %p89 = por %p87, %p88
      %p91 = scmp.ne.s32.totalorder %s76, %s90
      %p92 = scmp.eq.s32.totalorder %s19, 0
      %p93 = por %p91, %p92
      %s95 = sadd.s32 %s94, 1
      %p98 = scmp.eq.s32.totalorder %s13, 3
      %p99 = scmp.ne.s32.totalorder %s94, %s96
      %p100 = scmp.eq.s32.totalorder %s13, 0
      %p101 = por %p99, %p100
      %p102 = scmp.ne.s32.totalorder %s94, %s96
      %p103 = scmp.eq.s32.totalorder %s18, 3
      %p104 = por %p102, %p103
      %p105 = scmp.ne.s32.totalorder %s96, %s97
      %p106 = scmp.eq.s32.totalorder %s18, 0
      %p107 = por %p105, %p106
      %p108 = scmp.ne.s32.totalorder %s96, %s97
      %p109 = scmp.eq.s32.totalorder %s19, 3
      %p110 = por %p108, %p109
      %p112 = scmp.ne.s32.totalorder %s97, %s111
      %p113 = scmp.eq.s32.totalorder %s19, 0
      %p114 = por %p112, %p113
      %p115 = scmp.le.s32.totalorder 1, %s13
      %p116 = scmp.lt.s32.totalorder %s13, 5
      %p117 = pnand %p115, %p116
      %p118 = pneg %p117
      // Predicated region
      $region9: #{wm_tensor_detector.1} parent=5 // pred_check
        _
      $region10: #{wm_tensor_detector.1} parent=5 // pred_check_branch
        %120 = sbr.rel (%p117) target = $region12
      $region11: #{wm_tensor_detector.1} parent=5 // pred_region
        %s121 = ssub.s32 %s13, 1
        // Predicated region
        $region13: #{wm_tensor_detector.1} parent=11 // pred_check
          %p122 = pneg %p86
        $region14: #{wm_tensor_detector.1} parent=11 // pred_check_branch
          %124 = sbr.rel (%p122) target = $region16
        $region15: #{wm_tensor_detector.1} parent=11 // pred_region
          _
        $region16: #{wm_tensor_detector.1} parent=11 // pred_fallthru
          _
      $region12: #{wm_tensor_detector.1} parent=5 // pred_fallthru
        _
      %p125 = scmp.lt.s32.totalorder %s13, 4
      // Predicated region
      $region17: #{wm_tensor_detector.1} parent=5 // pred_check
        %p126 = pneg %p125
      $region18: #{wm_tensor_detector.1} parent=5 // pred_check_branch
        %128 = sbr.rel (%p126) target = $region20
      $region19: #{wm_tensor_detector.1} parent=5 // pred_region
        // Predicated region
        $region21: #{wm_tensor_detector.1} parent=19 // pred_check
          %p129 = pneg %p33
        $region22: #{wm_tensor_detector.1} parent=19 // pred_check_branch
          %131 = sbr.rel (%p129) target = $region24
        $region23: #{wm_tensor_detector.1} parent=19 // pred_region
          %s132 = smul.u32 8, %s13
          %p133 = scmp.lt.s32.totalorder %s132, 31
          %s134 = scalar_select %p133, %s132, 31
          %s135 = scalar_lea.vmem %s0, %s134
          %s136 = smul.u32 8, %s13
        $region24: #{wm_tensor_detector.1} parent=19 // pred_fallthru
          _
        // Predicated region
        $region25: #{wm_tensor_detector.1} parent=19 // pred_check
          %p137 = pneg %p59
        $region26: #{wm_tensor_detector.1} parent=19 // pred_check_branch
          %139 = sbr.rel (%p137) target = $region28
        $region27: #{wm_tensor_detector.1} parent=19 // pred_region
          %s140 = sand.u32 %s49, 1
          %s141 = scalar_lea.sflag [#allocation4], %s140
          %s142 = sand.u32 %s49, 1
          %s143 = smul.addr %s142, 128
          %s144 = scalar_lea.vmem [#allocation3], %s143
          %s145 = smul.u32 8, %s13
          %147 = vsyncadd %s141, 0
          %s148 = smul.addr %s145, 4
          %s149 = scalar_lea.hbm %s1, %s148
          %s150 = sshll.u32 %s149, 4
          %s151 = int_to_ptr.hbm [resolvable:$true] %s150
          %s152 = sshll.u32 %s144, 4
          %s153 = int_to_ptr.vmem [resolvable:$true] %s152
          %158 = dma.hbm_to_vmem [thread:$0]  %s151, 2048, %s153, %s141, 2048, 512, 32
        $region28: #{wm_tensor_detector.1} parent=19 // pred_fallthru
          _
      $region20: #{wm_tensor_detector.1} parent=5 // pred_fallthru
        _
      %p159 = scmp.le.s32.totalorder 1, %s13
      %p160 = scmp.lt.s32.totalorder %s13, 5
      %p161 = pnand %p159, %p160
      %p162 = pneg %p161
      // Predicated region
      $region29: #{wm_tensor_detector.1} parent=5 // pred_check
        _
      $region30: #{wm_tensor_detector.1} parent=5 // pred_check_branch
        %164 = sbr.rel (%p161) target = $region32
      $region31: #{wm_tensor_detector.1} parent=5 // pred_region
        %s165 = ssub.s32 %s13, 1
        %s166 = sand.u32 %s52, 1
        %s167 = scalar_lea.sflag [#allocation4], %s166
        %s168 = sand.u32 %s52, 1
        %s169 = smul.addr %s168, 128
        %s170 = scalar_lea.vmem [#allocation3], %s169
        // Predicated region
        $region33: #{wm_tensor_detector.1} parent=31 // pred_check
          %p171 = pneg %p65
        $region34: #{wm_tensor_detector.1} parent=31 // pred_check_branch
          %173 = sbr.rel (%p171) target = $region36
        $region35: #{wm_tensor_detector.1} parent=31 // pred_region
          %175 = dma.done %s167, 2048
        $region36: #{wm_tensor_detector.1} parent=31 // pred_fallthru
          _
        %s176 = smul.u32 8, %s18
        %p177 = scmp.lt.s32.totalorder %s176, 31
        %s178 = scalar_select %p177, %s176, 31
        %s179 = scalar_lea.vmem %s0, %s178
        %p180 = pneg %p39
        %p181 = pneg %p36
        %s182 = sand.u32 %s52, 1
        %s183 = scalar_lea.sflag [#allocation4], %s182
        %s184 = sand.u32 %s52, 1
        %s185 = smul.addr %s184, 128
        %s186 = scalar_lea.vmem [#allocation3], %s185
        %p187 = pneg %p65
        %p188 = pneg %p62
        %p189 = pneg %p86
        %p190 = pneg %p83
        %p191 = pneg %p107
        %p192 = pneg %p104
        %s193 = smul.u32 8, %s18
        %p194 = scmp.lt.s32.totalorder %s193, 31
        %s195 = scalar_select %p194, %s193, 31
        %s196 = scalar_lea.vmem %s0, %s195
        %s197 = smul.u32 8, %s18
        %s198 = smul.u32 8, %s18
        %p200 = scmp.eq.s32.totalorder %s18, 0
        // Predicated region
        $region37: #{wm_tensor_detector.1} parent=31 // pred_check
          %p201 = pneg %p200
        $region38: #{wm_tensor_detector.1} parent=31 // pred_check_branch
          %203 = sbr.rel (%p201) target = $region40
        $region39: #{wm_tensor_detector.1} parent=31 // pred_region
          %vm204 = vcmask 253952
          %205 = vst.msk [vmem:[#allocation2] sm:$0x1] %vm204, 0.0
        $region40: #{wm_tensor_detector.1} parent=31 // pred_fallthru
          _
        %v206 = vld [vmem:[%s196] sm:$0xff]
        %v207 = vmax.f32 %v206, 0.0
        %v208 = vmin.f32 %v207, 1.0
        %v209 = vmul.f32 %v208, 255.0
        %v210 = vfloor.f32 %v209
        %v211 = vld [vmem:[#allocation2] sm:$0x1]
        %v213 = vperm.slane %v210, 0
        %v214 = vperm.slane %v210, 1
        %v215 = vperm.slane %v210, 2
        %v216 = vperm.slane %v210, 3
        %v217 = vperm.slane %v210, 4
        %v218 = vperm.slane %v210, 5
        %v219 = vperm.slane %v210, 6
        %v220 = vperm.slane %v210, 7
        %v229 = vpack.c.bf16 %v213, %v213
        %v230 = vpack.c.bf16 %v214, %v214
        %v231 = vpack.c.bf16 %v215, %v215
        %v232 = vpack.c.bf16 %v216, %v216
        %v233 = vpack.c.bf16 %v217, %v217
        %v234 = vpack.c.bf16 %v218, %v218
        %v235 = vpack.c.bf16 %v219, %v219
        %v236 = vpack.c.bf16 %v220, %v220
        %v237 = vld [vmem:[%s170] sm:$0xff]
        %v238 = vld [vmem:[%s170 + $0x8] sm:$0xff]
        %v239 = vld [vmem:[%s170 + $0x10] sm:$0xff]
        %v240 = vld [vmem:[%s170 + $0x18] sm:$0xff]
        %v241 = vld [vmem:[%s170 + $0x20] sm:$0xff]
        %v242 = vld [vmem:[%s170 + $0x28] sm:$0xff]
        %v243 = vld [vmem:[%s170 + $0x30] sm:$0xff]
        %v244 = vld [vmem:[%s170 + $0x38] sm:$0xff]
        %v245 = vld [vmem:[%s170 + $0x40] sm:$0xff]
        %v246 = vld [vmem:[%s170 + $0x48] sm:$0xff]
        %v247 = vld [vmem:[%s170 + $0x50] sm:$0xff]
        %v248 = vld [vmem:[%s170 + $0x58] sm:$0xff]
        %v249 = vld [vmem:[%s170 + $0x60] sm:$0xff]
        %v250 = vld [vmem:[%s170 + $0x68] sm:$0xff]
        %v251 = vld [vmem:[%s170 + $0x70] sm:$0xff]
        %v252 = vld [vmem:[%s170 + $0x78] sm:$0xff]
        %v269 = vunpack.c.l.b16 %v237
        %v270 = vunpack.c.h.b16 %v237
        %v271 = vunpack.c.l.b16 %v238
        %v272 = vunpack.c.h.b16 %v238
        %v273 = vunpack.c.l.b16 %v239
        %v274 = vunpack.c.h.b16 %v239
        %v275 = vunpack.c.l.b16 %v240
        %v276 = vunpack.c.h.b16 %v240
        %v277 = vunpack.c.l.b16 %v241
        %v278 = vunpack.c.h.b16 %v241
        %v279 = vunpack.c.l.b16 %v242
        %v280 = vunpack.c.h.b16 %v242
        %v281 = vunpack.c.l.b16 %v243
        %v282 = vunpack.c.h.b16 %v243
        %v283 = vunpack.c.l.b16 %v244
        %v284 = vunpack.c.h.b16 %v244
        %v285 = vunpack.c.l.b16 %v245
        %v286 = vunpack.c.h.b16 %v245
        %v287 = vunpack.c.l.b16 %v246
        %v288 = vunpack.c.h.b16 %v246
        %v289 = vunpack.c.l.b16 %v247
        %v290 = vunpack.c.h.b16 %v247
        %v291 = vunpack.c.l.b16 %v248
        %v292 = vunpack.c.h.b16 %v248
        %v293 = vunpack.c.l.b16 %v249
        %v294 = vunpack.c.h.b16 %v249
        %v295 = vunpack.c.l.b16 %v250
        %v296 = vunpack.c.h.b16 %v250
        %v297 = vunpack.c.l.b16 %v251
        %v298 = vunpack.c.h.b16 %v251
        %v299 = vunpack.c.l.b16 %v252
        %v300 = vunpack.c.h.b16 %v252
        %v301 = vpack.c.b16 %v277, %v269
        %v302 = vpack.c.b16 %v278, %v270
        %v303 = vpack.c.b16 %v279, %v271
        %v304 = vpack.c.b16 %v280, %v272
        %v305 = vpack.c.b16 %v281, %v273
        %v306 = vpack.c.b16 %v282, %v274
        %v307 = vpack.c.b16 %v283, %v275
        %v308 = vpack.c.b16 %v284, %v276
        %v309 = vpack.c.b16 %v293, %v285
        %v310 = vpack.c.b16 %v294, %v286
        %v311 = vpack.c.b16 %v295, %v287
        %v312 = vpack.c.b16 %v296, %v288
        %v313 = vpack.c.b16 %v297, %v289
        %v314 = vpack.c.b16 %v298, %v290
        %v315 = vpack.c.b16 %v299, %v291
        %v316 = vpack.c.b16 %v300, %v292
        %333 = vmatpush.bf16.xpose.msra.mxu0 0
        %334 = vmatpush.bf16.xpose.msra.mxu0 0
        %335 = vmatpush.bf16.xpose.msra.mxu0 0
        %336 = vmatpush.bf16.xpose.msra.mxu0 0
        %337 = vmatpush.bf16.xpose.msra.mxu0 0
        %338 = vmatpush.bf16.xpose.msra.mxu0 0
        %339 = vmatpush.bf16.xpose.msra.mxu0 %v309
        %340 = vmatpush.bf16.xpose.msra.mxu0 %v301
        %341 = vmatmul.bf16.gmra.mxu0 %v229
        %v342 = vpop.f32.mrf.mxu0
        %v343 = vadd.f32 0.0, %v342
        %v344 = vpop.f32.mrf.mxu0
        %345 = vdwg.mxu0
        %346 = vmatpush.bf16.xpose.msra.mxu0 0
        %347 = vmatpush.bf16.xpose.msra.mxu0 0
        %348 = vmatpush.bf16.xpose.msra.mxu0 0
        %349 = vmatpush.bf16.xpose.msra.mxu0 0
        %350 = vmatpush.bf16.xpose.msra.mxu0 0
        %351 = vmatpush.bf16.xpose.msra.mxu0 0
        %352 = vmatpush.bf16.xpose.msra.mxu0 %v310
        %353 = vmatpush.bf16.xpose.msra.mxu0 %v302
        %354 = vmatmul.bf16.gmra.mxu0 %v230
        %v355 = vpop.f32.mrf.mxu0
        %v356 = vadd.f32 %v343, %v355
        %v357 = vpop.f32.mrf.mxu0
        %358 = vdwg.mxu0
        %359 = vmatpush.bf16.xpose.msra.mxu0 0
        %360 = vmatpush.bf16.xpose.msra.mxu0 0
        %361 = vmatpush.bf16.xpose.msra.mxu0 0
        %362 = vmatpush.bf16.xpose.msra.mxu0 0
        %363 = vmatpush.bf16.xpose.msra.mxu0 0
        %364 = vmatpush.bf16.xpose.msra.mxu0 0
        %365 = vmatpush.bf16.xpose.msra.mxu0 %v311
        %366 = vmatpush.bf16.xpose.msra.mxu0 %v303
        %367 = vmatmul.bf16.gmra.mxu0 %v231
        %v368 = vpop.f32.mrf.mxu0
        %v369 = vadd.f32 %v356, %v368
        %v370 = vpop.f32.mrf.mxu0
        %371 = vdwg.mxu0
        %372 = vmatpush.bf16.xpose.msra.mxu0 0
        %373 = vmatpush.bf16.xpose.msra.mxu0 0
        %374 = vmatpush.bf16.xpose.msra.mxu0 0
        %375 = vmatpush.bf16.xpose.msra.mxu0 0
        %376 = vmatpush.bf16.xpose.msra.mxu0 0
        %377 = vmatpush.bf16.xpose.msra.mxu0 0
        %378 = vmatpush.bf16.xpose.msra.mxu0 %v312
        %379 = vmatpush.bf16.xpose.msra.mxu0 %v304
        %380 = vmatmul.bf16.gmra.mxu0 %v232
        %v381 = vpop.f32.mrf.mxu0
        %v382 = vadd.f32 %v369, %v381
        %v383 = vpop.f32.mrf.mxu0
        %384 = vdwg.mxu0
        %385 = vmatpush.bf16.xpose.msra.mxu0 0
        %386 = vmatpush.bf16.xpose.msra.mxu0 0
        %387 = vmatpush.bf16.xpose.msra.mxu0 0
        %388 = vmatpush.bf16.xpose.msra.mxu0 0
        %389 = vmatpush.bf16.xpose.msra.mxu0 0
        %390 = vmatpush.bf16.xpose.msra.mxu0 0
        %391 = vmatpush.bf16.xpose.msra.mxu0 %v313
        %392 = vmatpush.bf16.xpose.msra.mxu0 %v305
        %393 = vmatmul.bf16.gmra.mxu0 %v233
        %v394 = vpop.f32.mrf.mxu0
        %v395 = vadd.f32 %v382, %v394
        %v396 = vpop.f32.mrf.mxu0
        %397 = vdwg.mxu0
        %398 = vmatpush.bf16.xpose.msra.mxu0 0
        %399 = vmatpush.bf16.xpose.msra.mxu0 0
        %400 = vmatpush.bf16.xpose.msra.mxu0 0
        %401 = vmatpush.bf16.xpose.msra.mxu0 0
        %402 = vmatpush.bf16.xpose.msra.mxu0 0
        %403 = vmatpush.bf16.xpose.msra.mxu0 0
        %404 = vmatpush.bf16.xpose.msra.mxu0 %v314
        %405 = vmatpush.bf16.xpose.msra.mxu0 %v306
        %406 = vmatmul.bf16.gmra.mxu0 %v234
        %v407 = vpop.f32.mrf.mxu0
        %v408 = vadd.f32 %v395, %v407
        %v409 = vpop.f32.mrf.mxu0
        %410 = vdwg.mxu0
        %411 = vmatpush.bf16.xpose.msra.mxu0 0
        %412 = vmatpush.bf16.xpose.msra.mxu0 0
        %413 = vmatpush.bf16.xpose.msra.mxu0 0
        %414 = vmatpush.bf16.xpose.msra.mxu0 0
        %415 = vmatpush.bf16.xpose.msra.mxu0 0
        %416 = vmatpush.bf16.xpose.msra.mxu0 0
        %417 = vmatpush.bf16.xpose.msra.mxu0 %v315
        %418 = vmatpush.bf16.xpose.msra.mxu0 %v307
        %419 = vmatmul.bf16.gmra.mxu0 %v235
        %v420 = vpop.f32.mrf.mxu0
        %v421 = vadd.f32 %v408, %v420
        %v422 = vpop.f32.mrf.mxu0
        %423 = vdwg.mxu0
        %424 = vmatpush.bf16.xpose.msra.mxu0 0
        %425 = vmatpush.bf16.xpose.msra.mxu0 0
        %426 = vmatpush.bf16.xpose.msra.mxu0 0
        %427 = vmatpush.bf16.xpose.msra.mxu0 0
        %428 = vmatpush.bf16.xpose.msra.mxu0 0
        %429 = vmatpush.bf16.xpose.msra.mxu0 0
        %430 = vmatpush.bf16.xpose.msra.mxu0 %v316
        %431 = vmatpush.bf16.xpose.msra.mxu0 %v308
        %432 = vmatmul.bf16.gmra.mxu0 %v236
        %v433 = vpop.f32.mrf.mxu0
        %v434 = vadd.f32 %v421, %v433
        %v435 = vpop.f32.mrf.mxu0
        %436 = vdwg.mxu0
        %v437 = vadd.f32 %v211, %v434
        %vm438 = vcmask 253952
        %439 = vst.msk [vmem:[#allocation2] sm:$0x1] %vm438, %v437
        %p440 = scmp.eq.s32.totalorder %s18, 3
        // Predicated region
        $region41: #{wm_tensor_detector.1} parent=31 // pred_check
          %p441 = pneg %p440
        $region42: #{wm_tensor_detector.1} parent=31 // pred_check_branch
          %443 = sbr.rel (%p441) target = $region44
        $region43: #{wm_tensor_detector.1} parent=31 // pred_region
          %v444 = vld [vmem:[#allocation2] sm:$0x1]
          %vm445 = vcmp.gt.f32.partialorder %v444, 0.0
          %v446 = vsel %vm445, 1, 0
          %v447 = vcvt.s32.f32 %v446
          %v448 = vld [vmem:[%s2] sm:$0x1]
          %v449 = vsub.f32 %v447, %v448
          %v450 = vand.u32 2147483647, %v449
          %v451 = vsel %vm438, %v450, 0.0
          %452 = vadd.xlane.f32.xlu0 %v451
          %v453 = vpop.xlane.xlu0 %452
          %v454 = vrcp.pop 32.0
          %v455 = vmul.f32 32.0, %v454
          %v456 = vsub.f32 1.0, %v455
          %v457 = vmul.f32 %v454, %v456
          %v458 = vadd.f32 %v454, %v457
          %vm459 = vweird.f32 %v454
          %v460 = vsel %vm459, %v454, %v458
          %v461 = vmul.f32 %v453, %v460
          %v462 = vsub.f32 1.0, %v461
          %vm463 = vcmp.gt.f32.partialorder %v462, 0.8
          %vm464 = vcmp.lt.f32.partialorder %v462, 0.2
          %vm465 = vmor %vm463, %vm464
          %v466 = vsel %vm465, 1, 0
          %v467 = vlaneseq
          %v468 = vand.u32 %v467, 127
          %vm469 = vcmp.eq.s32.totalorder %v468, %v466
          %v470 = vsel %vm469, 1, 0
          %vm471 = vcmask 8192
          %472 = vst.msk [vmem:[#allocation6] sm:$0x1] %vm471, %v470
        $region44: #{wm_tensor_detector.1} parent=31 // pred_fallthru
          _
        // Predicated region
        $region45: #{wm_tensor_detector.1} parent=31 // pred_check
          %p473 = pneg %p104
        $region46: #{wm_tensor_detector.1} parent=31 // pred_check_branch
          %475 = sbr.rel (%p473) target = $region48
        $region47: #{wm_tensor_detector.1} parent=31 // pred_region
          %477 = vsyncadd [#allocation5], 0
          %s479 = sshll.u32 [#allocation6], 4
          %s480 = int_to_ptr.vmem [resolvable:$true] %s479
          %s481 = sshll.u32 %s3, 4
          %s482 = int_to_ptr.hbm [resolvable:$true] %s481
          %484 = dma.vmem_to_hbm [thread:$0]  %s480, 16, %s482, [#allocation5]
        $region48: #{wm_tensor_detector.1} parent=31 // pred_fallthru
          _
        // Predicated region
        $region49: #{wm_tensor_detector.1} parent=31 // pred_check
          %p485 = pneg %p104
        $region50: #{wm_tensor_detector.1} parent=31 // pred_check_branch
          %487 = sbr.rel (%p485) target = $region52
        $region51: #{wm_tensor_detector.1} parent=31 // pred_region
          %489 = dma.done [#allocation5], 16
        $region52: #{wm_tensor_detector.1} parent=31 // pred_fallthru
          _
      $region32: #{wm_tensor_detector.1} parent=5 // pred_fallthru
        _
      %p490 = scmp.le.s32.totalorder 2, %s13
      // Predicated region
      $region53: #{wm_tensor_detector.1} parent=5 // pred_check
        %p491 = pneg %p490
      $region54: #{wm_tensor_detector.1} parent=5 // pred_check_branch
        %493 = sbr.rel (%p491) target = $region56
      $region55: #{wm_tensor_detector.1} parent=5 // pred_region
        %s494 = ssub.s32 %s13, 2
      $region56: #{wm_tensor_detector.1} parent=5 // pred_fallthru
        _
    $region6: #{wm_tensor_detector.1} parent=1 // loop_footer
      %s17 = sadd.s32 1, %s13
    $region7: #{wm_tensor_detector.1} parent=1 // loop_footer_branch
      %12 = sbr.rel target = $region3
    $region8: #{wm_tensor_detector.1} parent=1 // loop_exit
      _
    %495 = vsyncpa [#allocation4], 1
    %s496 = scalar_lea.sflag [#allocation4], 1
    %497 = vsyncpa %s496, 1
    %498 = vsyncpa [#allocation5], 1
    %s499 = scalar_lea.sflag [#allocation5], 1
    %500 = vsyncpa %s499, 1

</llo_original>
